<compile_context>
chip_gen: v7x
topology: tpu7x:2x2x1
jax: 0.10.0
libtpu: 0.0.40
codegen_flags: <defaults>
</compile_context>

<pallas_src>
import math

import jax
import jax.numpy as jnp
import numpy as np
from jax.experimental import pallas as pl
from jax.experimental.pallas import tpu as pltpu


def _round_up(a, m):
    return ((a + m - 1) // m) * m


def _deconv_gemm_kernel(w_ref, x_ref, b_ref, o_ref):
    # w_ref: (TN, Cin)      weight tile, rows ordered (co, k_1, ..., k_d)   [resident]
    # x_ref: (1, Cin, TM)   channel-major input tile, TM flat pixels on lanes
    # b_ref: (TN, 1)        bias column (bias[co] replicated over kernel offsets)
    # o_ref: (1, TN, TM)    output tile (lanes = pixels, dense)
    acc = jax.lax.dot_general(
        w_ref[...], x_ref[0],
        dimension_numbers=(((1,), (0,)), ((), ())),
        preferred_element_type=jnp.float32,
    )
    o_ref[0] = (acc + b_ref[...]).astype(o_ref.dtype)


def full_stride_deconv_nd(x, weight, bias, kernel_size=None, *,
                          tn_cap=1024, tm_cap=8192,
                          vmem_budget_bytes=24 * 1024 * 1024):
    """ConvTransposeNd (dim = 1/2/3) with stride == kernel_size, no padding.

    x      : [B, Cin, *spatial]
    weight : [Cin, Cout, K, ...]   (PyTorch ConvTransposeNd.weight layout)
    bias   : [Cout]
    returns: [B, Cout, *(s * K for s in spatial)]
    """
    B, Cin = x.shape[0], x.shape[1]
    spatial = tuple(x.shape[2:])
    d = len(spatial)
    assert 1 <= d <= 3, "dim should be 1, 2 or 3"
    Cin_w, Cout = weight.shape[0], weight.shape[1]
    ks = tuple(weight.shape[2:])
    assert Cin_w == Cin and len(ks) == d
    K = ks[0]
    assert all(k == K for k in ks)
    if kernel_size is not None:
        assert K == kernel_size

    HW = math.prod(spatial)          # flattened spatial size
    N = Cout * (K ** d)              # GEMM "N" = (co, k_1, ..., k_d)

    # ---- tile selection (N tile first, then size TM from a VMEM budget) ----
    if N <= tn_cap:
        TN = _round_up(N, 8)
        Np = TN
    else:
        TN = _round_up(tn_cap, 128)
        Np = _round_up(N, TN)

    # f32, double-buffered: per-TM-lane bytes (out column + x column) + fixed (w + bias tiles,
    # lane-padded to 128 in VMEM).
    per_lane = 2 * 4 * (_round_up(TN, 8) + _round_up(Cin, 8))
    fixed = 2 * 4 * 2 * _round_up(TN, 8) * 128
    tm_budget = max(128, (vmem_budget_bytes - fixed) // per_lane)
    tm_budget = max(128, (tm_budget // 128) * 128)
    TM = int(min(tm_budget, tm_cap, _round_up(HW, 128)))
    TM = max(128, (TM // 128) * 128)
    HWp = _round_up(HW, TM)

    # ---- GEMM operands (cheap glue on the small tensors only; no big transposes here) ----
    x_flat = x.reshape(B, Cin, HW)                       # free reshape of NC(D)HW, channel-major
    if HWp != HW:
        x_flat = jnp.pad(x_flat, ((0, 0), (0, 0), (0, HWp - HW)))

    w2d = jnp.transpose(weight.reshape(Cin, N), (1, 0))  # (N, Cin); rows = (co, k_1..k_d); tiny
    b_col = jnp.repeat(bias, K ** d)                     # (N,); row n -> bias[co]
    if Np != N:
        w2d = jnp.pad(w2d, ((0, Np - N), (0, 0)))
        b_col = jnp.pad(b_col, (0, Np - N))
    b_col = b_col.reshape(Np, 1)

    grid = (Np // TN, B, HWp // TM)   # N outermost -> weight/bias tiles resident across inner axes

    vmem_est = 2 * 4 * (_round_up(TN, 8) * 128      # weight tile (lane padded in VMEM)
                        + _round_up(Cin, 8) * TM    # x tile
                        + _round_up(TN, 8) * TM     # out tile
                        + _round_up(TN, 8) * 128)   # bias tile
    vmem_limit = int(min(max(vmem_est + (8 << 20), 32 << 20), 48 << 20))

    y_gemm = pl.pallas_call(
        _deconv_gemm_kernel,
        out_shape=jax.ShapeDtypeStruct((B, Np, HWp), x.dtype),
        grid_spec=pltpu.PrefetchScalarGridSpec(
            num_scalar_prefetch=0,
            grid=grid,
            in_specs=[
                pl.BlockSpec((TN, Cin), lambda n, b, m: (n, 0)),
                pl.BlockSpec((1, Cin, TM), lambda n, b, m: (b, 0, m)),
                pl.BlockSpec((TN, 1), lambda n, b, m: (n, 0)),
            ],
            out_specs=pl.BlockSpec((1, TN, TM), lambda n, b, m: (b, n, m)),
        ),
        compiler_params=pltpu.CompilerParams(
            dimension_semantics=("parallel", "parallel", "parallel"),
            vmem_limit_bytes=vmem_limit,
        ),
    )(w2d, x_flat, b_col)

    # ---- scatter back to the PyTorch NC(D)HW layout (XLA transpose, see TODO above) ----
    y = y_gemm[:, :N, :HW].reshape((B, Cout) + (K,) * d + spatial)
    perm = (0, 1) + tuple(ax for i in range(d) for ax in (2 + d + i, 2 + i))
    y = jnp.transpose(y, perm)
    out_spatial = tuple(s * K for s in spatial)
    return y.reshape((B, Cout) + out_spatial)


if __name__ == "__main__":
    key = jax.random.PRNGKey(0)
    deconv = jax.jit(full_stride_deconv_nd, static_argnames=("kernel_size",))
    hi = jax.lax.Precision.HIGHEST

    # ---------------- 2-D case (primary) ----------------
    B, Cin, H, W = 2, 4, 16, 16
    Cout, K = 8, 4
    k1, k2, k3, key = jax.random.split(key, 4)
    bound = 1.0 / np.sqrt(Cin * K * K)
    x2 = jax.random.normal(k1, (B, Cin, H, W), jnp.float32)
    w2 = jax.random.uniform(k2, (Cin, Cout, K, K), jnp.float32, -bound, bound)
    b2 = jax.random.uniform(k3, (Cout,), jnp.float32, -bound, bound)

    y2 = jax.block_until_ready(deconv(x2, w2, b2, kernel_size=K))
    ref2 = (jnp.einsum("bchw,cokl->bohkwl", x2, w2, precision=hi)
            .reshape(B, Cout, H * K, W * K) + b2[None, :, None, None])
    assert y2.shape == (B, Cout, H * K, W * K)
    np.testing.assert_allclose(np.asarray(y2), np.asarray(ref2), rtol=1e-4, atol=1e-4)

    # ---------------- 1-D case (exercises N and M padding paths) ----------------
    B1, Cin1, L, Cout1, K1 = 2, 4, 32, 8, 3
    k1, k2, k3, key = jax.random.split(key, 4)
    bound = 1.0 / np.sqrt(Cin1 * K1)
    x1 = jax.random.normal(k1, (B1, Cin1, L), jnp.float32)
    w1 = jax.random.uniform(k2, (Cin1, Cout1, K1), jnp.float32, -bound, bound)
    b1 = jax.random.uniform(k3, (Cout1,), jnp.float32, -bound, bound)

    y1 = jax.block_until_ready(deconv(x1, w1, b1, kernel_size=K1))
    ref1 = (jnp.einsum("bcl,cok->bolk", x1, w1, precision=hi)
            .reshape(B1, Cout1, L * K1) + b1[None, :, None])
    assert y1.shape == (B1, Cout1, L * K1)
    np.testing.assert_allclose(np.asarray(y1), np.asarray(ref1), rtol=1e-4, atol=1e-4)

    # ---------------- 3-D case ----------------
    B3, Cin3, D3, H3, W3, Cout3, K3 = 1, 3, 4, 4, 4, 5, 2
    k1, k2, k3, key = jax.random.split(key, 4)
    bound = 1.0 / np.sqrt(Cin3 * K3 ** 3)
    x3 = jax.random.normal(k1, (B3, Cin3, D3, H3, W3), jnp.float32)
    w3 = jax.random.uniform(k2, (Cin3, Cout3, K3, K3, K3), jnp.float32, -bound, bound)
    b3 = jax.random.uniform(k3, (Cout3,), jnp.float32, -bound, bound)

    y3 = jax.block_until_ready(deconv(x3, w3, b3, kernel_size=K3))
    ref3 = (jnp.einsum("bcdhw,coijk->bodihjwk", x3, w3, precision=hi)
            .reshape(B3, Cout3, D3 * K3, H3 * K3, W3 * K3)
            + b3[None, :, None, None, None])
    assert y3.shape == (B3, Cout3, D3 * K3, H3 * K3, W3 * K3)
    np.testing.assert_allclose(np.asarray(y3), np.asarray(ref3), rtol=1e-4, atol=1e-4)

    print("KERNEL_OK")
</pallas_src>

<mosaic_0001>
module attributes {stable_mosaic.version = 11 : i64} {
  func.func @_deconv_gemm_kernel(%arg0: i32, %arg1: i32, %arg2: i32, %arg3: memref<128x4xf32, #tpu.memory_space<vmem>>, %arg4: memref<1x4x256xf32, #tpu.memory_space<vmem>>, %arg5: memref<128x1xf32, #tpu.memory_space<vmem>>, %arg6: memref<1x128x256xf32, #tpu.memory_space<vmem>>) attributes {dimension_semantics = [#tpu.dimension_semantics<parallel>, #tpu.dimension_semantics<parallel>, #tpu.dimension_semantics<parallel>], iteration_bounds = array<i64: 1, 2, 1>, scalar_prefetch = 0 : i64, scratch_operands = 0 : i64, tpu.core_type = #tpu.core_type<tc>, window_params = [{transform_indices = @transform_0, window_bounds = array<i64: 128, 4>}, {transform_indices = @transform_1, window_bounds = array<i64: 1, 4, 256>}, {transform_indices = @transform_2, window_bounds = array<i64: 128, 1>}, {transform_indices = @transform_3, window_bounds = array<i64: 1, 128, 256>}]} {
    %c0 = arith.constant 0 : index
    %c0_0 = arith.constant 0 : index
    %0 = vector.load %arg3[%c0, %c0_0] : memref<128x4xf32, #tpu.memory_space<vmem>>, vector<128x4xf32>
    %c0_1 = arith.constant 0 : index
    %c0_2 = arith.constant 0 : index
    %c0_3 = arith.constant 0 : index
    %1 = vector.load %arg4[%c0_1, %c0_2, %c0_3] : memref<1x4x256xf32, #tpu.memory_space<vmem>>, vector<1x4x256xf32>
    %2 = vector.shape_cast %1 : vector<1x4x256xf32> to vector<4x256xf32>
    %cst = arith.constant dense<0.000000e+00> : vector<128x256xf32>
    %3 = tpu.matmul %0, %2, %cst {dimension_numbers = #tpu.dot_dimension_numbers<[1], [0], [0], [1], [0, 0, 1, 1], [], []>} : vector<128x4xf32>, vector<4x256xf32>, vector<128x256xf32> -> vector<128x256xf32>
    %c0_4 = arith.constant 0 : index
    %c0_5 = arith.constant 0 : index
    %4 = vector.load %arg5[%c0_4, %c0_5] : memref<128x1xf32, #tpu.memory_space<vmem>>, vector<128x1xf32>
    %5 = vector.broadcast %4 : vector<128x1xf32> to vector<128x256xf32>
    %6 = arith.addf %3, %5 : vector<128x256xf32>
    %c0_6 = arith.constant 0 : index
    %c0_7 = arith.constant 0 : index
    %c0_8 = arith.constant 0 : index
    %7 = vector.load %arg6[%c0_6, %c0_7, %c0_8] : memref<1x128x256xf32, #tpu.memory_space<vmem>>, vector<1x128x256xf32>
    %8 = vector.shape_cast %7 : vector<1x128x256xf32> to vector<128x256xf32>
    %9 = vector.shape_cast %6 : vector<128x256xf32> to vector<1x128x256xf32>
    tpu.vector_store %arg6[%c0_6, %c0_7, %c0_8], %9 {strides = array<i32>} : memref<1x128x256xf32, #tpu.memory_space<vmem>>, vector<1x128x256xf32>,
    return
  }
  func.func @transform_0(%arg0: i32, %arg1: i32, %arg2: i32) -> (i32, i32) {
    %c0_i32 = arith.constant 0 : i32
    %c0_i32_0 = arith.constant 0 : i32
    return %arg0, %c0_i32 : i32, i32
  }
  func.func @transform_1(%arg0: i32, %arg1: i32, %arg2: i32) -> (i32, i32, i32) {
    %c0_i32 = arith.constant 0 : i32
    %c0_i32_0 = arith.constant 0 : i32
    return %arg1, %c0_i32, %arg2 : i32, i32, i32
  }
  func.func @transform_2(%arg0: i32, %arg1: i32, %arg2: i32) -> (i32, i32) {
    %c0_i32 = arith.constant 0 : i32
    %c0_i32_0 = arith.constant 0 : i32
    return %arg0, %c0_i32 : i32, i32
  }
  func.func @transform_3(%arg0: i32, %arg1: i32, %arg2: i32) -> (i32, i32, i32) {
    %c0_i32 = arith.constant 0 : i32
    return %arg1, %arg0, %arg2 : i32, i32, i32
  }
}

</mosaic_0001>

<llo_original>
// kernel: full_stride_deconv_nd.1
$region0: #{full_stride_deconv_nd.1}
  #allocation0 [shape = 'u32[]', space=smem, size = 0x4, offset = 0x4, fixed_abs, tag = 'smem constant byte address 0x4 - core index']
  #allocation1 [shape = 'u32[144,128]{1,0:T(1,128)}', space=vmem, size = 0x12000, scoped, tag = 'internal scratch']
  %s0 = inlined_call_operand.vmem [shape: f32[128,4], index: 0, kind: input, shape index: {}]
  %s1 = inlined_call_operand.vmem [shape: f32[2,4,256], index: 1, kind: input, shape index: {}]
  %s2 = inlined_call_operand.vmem [shape: f32[128,1], index: 2, kind: input, shape index: {}]
  %s3 = inlined_call_operand.vmem [shape: f32[2,128,256], index: 3, kind: output, shape index: {}]
  %s4 = sld [smem:[#allocation0]]
  $region45: #{full_stride_deconv_nd.1} parent=0
    _
  %s6 = ssub.s32 1, %s4
  %s7 = scalar_select 0, %s6, %s4
  loop: start=0, step=1, limit=4
  $region2: #{full_stride_deconv_nd.1} parent=0 // loop_pre_header
    _
  $region3: #{full_stride_deconv_nd.1} parent=0 // loop_header
    %s9 = sphi 0, %s13
    %p10 = scmp.ge.s32.totalorder %s9, 4
    %s16 = sphi 0, %s35
    %s17 = sphi 0, %s31
    %s18 = sphi 0, %s27
    %s19 = sphi 0, %s16
    %s20 = sphi 0, %s17
    %s21 = sphi 0, %s18
    %s22 = sphi 0, %s19
    %s23 = sphi 0, %s20
    %s24 = sphi 0, %s21
    %s38 = sphi 0, %s40
    %s41 = sphi 0, %s38
    %s42 = sphi 0, %s41
    %s58 = sphi 0, %s42
    %s66 = sphi 0, %s68
    %s69 = sphi 0, %s66
    %s70 = sphi 0, %s69
    %s86 = sphi 0, %s70
    %s92 = sphi 0, %s94
    %s95 = sphi 0, %s92
    %s96 = sphi 0, %s95
    %s112 = sphi 0, %s96
    %s122 = sphi 0, %s124
    %s125 = sphi 0, %s122
    %s126 = sphi 0, %s125
    %s142 = sphi 0, %s126
  $region4: #{full_stride_deconv_nd.1} parent=0 // loop_header_branch
    %12 = sbr.rel (%p10) target = $region8
  $region5: #{full_stride_deconv_nd.1} parent=0 // loop_body
    %s14 = ssub.s32 %s9, 1
    %s15 = ssub.s32 %s9, 2
    %s25 = sadd.s32 1, %s18
    %p26 = scmp.ge.s32.totalorder %s25, 1
    %s27 = scalar_select %p26, 0, %s25
    %s28 = sadd.s32 1, %s17
    %s29 = scalar_select %p26, %s28, %s17
    %p30 = scmp.ge.s32.totalorder %s29, 2
    %s31 = scalar_select %p30, 0, %s29
    %s32 = sadd.s32 1, %s16
    %s33 = scalar_select %p30, %s32, %s16
    %p34 = scmp.ge.s32.totalorder %s33, 1
    %s35 = scalar_select %p34, 0, %s33
    %s36 = ssub.s32 %s16, %s35
    %p37 = scmp.eq.s32.totalorder %s36, 0
    %s39 = sadd.s32 %s38, 1
    %s40 = scalar_select %p37, %s38, %s39
    %p43 = pneg %p37
    %p44 = scmp.eq.s32.totalorder %s9, 1
    %p45 = por %p43, %p44
    %p46 = scmp.ne.s32.totalorder %s38, %s41
    %p47 = scmp.eq.s32.totalorder %s9, 0
    %p48 = por %p46, %p47
    %p49 = scmp.ne.s32.totalorder %s38, %s41
    %p50 = scmp.eq.s32.totalorder %s14, 1
    %p51 = por %p49, %p50
    %p52 = scmp.ne.s32.totalorder %s41, %s42
    %p53 = scmp.eq.s32.totalorder %s14, 0
    %p54 = por %p52, %p53
    %p55 = scmp.ne.s32.totalorder %s41, %s42
    %p56 = scmp.eq.s32.totalorder %s15, 1
    %p57 = por %p55, %p56
    %p59 = scmp.ne.s32.totalorder %s42, %s58
    %p60 = scmp.eq.s32.totalorder %s15, 0
    %p61 = por %p59, %p60
    %s62 = ssub.s32 %s17, %s31
    %s63 = ssub.s32 %s18, %s27
    %s64 = sor.u32 %s62, %s63
    %p65 = scmp.eq.s32.totalorder %s64, 0
    %s67 = sadd.s32 %s66, 1
    %s68 = scalar_select %p65, %s66, %s67
    %p71 = pneg %p65
    %p72 = scmp.eq.s32.totalorder %s9, 1
    %p73 = por %p71, %p72
    %p74 = scmp.ne.s32.totalorder %s66, %s69
    %p75 = scmp.eq.s32.totalorder %s9, 0
    %p76 = por %p74, %p75
    %p77 = scmp.ne.s32.totalorder %s66, %s69
    %p78 = scmp.eq.s32.totalorder %s14, 1
    %p79 = por %p77, %p78
    %p80 = scmp.ne.s32.totalorder %s69, %s70
    %p81 = scmp.eq.s32.totalorder %s14, 0
    %p82 = por %p80, %p81
    %p83 = scmp.ne.s32.totalorder %s69, %s70
    %p84 = scmp.eq.s32.totalorder %s15, 1
    %p85 = por %p83, %p84
    %p87 = scmp.ne.s32.totalorder %s70, %s86
    %p88 = scmp.eq.s32.totalorder %s15, 0
    %p89 = por %p87, %p88
    %s90 = ssub.s32 %s16, %s35
    %p91 = scmp.eq.s32.totalorder %s90, 0
    %s93 = sadd.s32 %s92, 1
    %s94 = scalar_select %p91, %s92, %s93
    %p97 = pneg %p91
    %p98 = scmp.eq.s32.totalorder %s9, 1
    %p99 = por %p97, %p98
    %p100 = scmp.ne.s32.totalorder %s92, %s95
    %p101 = scmp.eq.s32.totalorder %s9, 0
    %p102 = por %p100, %p101
    %p103 = scmp.ne.s32.totalorder %s92, %s95
    %p104 = scmp.eq.s32.totalorder %s14, 1
    %p105 = por %p103, %p104
    %p106 = scmp.ne.s32.totalorder %s95, %s96
    %p107 = scmp.eq.s32.totalorder %s14, 0
    %p108 = por %p106, %p107
    %p109 = scmp.ne.s32.totalorder %s95, %s96
    %p110 = scmp.eq.s32.totalorder %s15, 1
    %p111 = por %p109, %p110
    %p113 = scmp.ne.s32.totalorder %s96, %s112
    %p114 = scmp.eq.s32.totalorder %s15, 0
    %p115 = por %p113, %p114
    %s116 = ssub.s32 %s17, %s31
    %s117 = ssub.s32 %s16, %s35
    %s118 = sor.u32 %s116, %s117
    %s119 = ssub.s32 %s18, %s27
    %s120 = sor.u32 %s118, %s119
    %p121 = scmp.eq.s32.totalorder %s120, 0
    %s123 = sadd.s32 %s122, 1
    %s124 = scalar_select %p121, %s122, %s123
    %p127 = pneg %p121
    %p128 = scmp.eq.s32.totalorder %s9, 1
    %p129 = por %p127, %p128
    %p130 = scmp.ne.s32.totalorder %s122, %s125
    %p131 = scmp.eq.s32.totalorder %s9, 0
    %p132 = por %p130, %p131
    %p133 = scmp.ne.s32.totalorder %s122, %s125
    %p134 = scmp.eq.s32.totalorder %s14, 1
    %p135 = por %p133, %p134
    %p136 = scmp.ne.s32.totalorder %s125, %s126
    %p137 = scmp.eq.s32.totalorder %s14, 0
    %p138 = por %p136, %p137
    %p139 = scmp.ne.s32.totalorder %s125, %s126
    %p140 = scmp.eq.s32.totalorder %s15, 1
    %p141 = por %p139, %p140
    %p143 = scmp.ne.s32.totalorder %s126, %s142
    %p144 = scmp.eq.s32.totalorder %s15, 0
    %p145 = por %p143, %p144
    %p146 = scmp.le.s32.totalorder 1, %s9
    %p147 = scmp.lt.s32.totalorder %s9, 3
    %p148 = pnand %p146, %p147
    %p149 = pneg %p148
    // Predicated region
    $region9: #{full_stride_deconv_nd.1} parent=5 // pred_check
      _
    $region10: #{full_stride_deconv_nd.1} parent=5 // pred_check_branch
      %151 = sbr.rel (%p148) target = $region12
    $region11: #{full_stride_deconv_nd.1} parent=5 // pred_region
      %s152 = ssub.s32 %s9, 1
      // Predicated region
      $region13: #{full_stride_deconv_nd.1} parent=11 // pred_check
        %p153 = pneg %p54
      $region14: #{full_stride_deconv_nd.1} parent=11 // pred_check_branch
        %155 = sbr.rel (%p153) target = $region16
      $region15: #{full_stride_deconv_nd.1} parent=11 // pred_region
        %s156 = smul.u32 16, %s19
        %p157 = scmp.lt.s32.totalorder %s156, 15
        %s158 = scalar_select %p157, %s156, 15
        %s159 = smul.addr %s158, 8
        %s160 = scalar_lea.vmem %s0, %s159
        %s161 = smul.u32 16, %s19
      $region16: #{full_stride_deconv_nd.1} parent=11 // pred_fallthru
        _
      // Predicated region
      $region17: #{full_stride_deconv_nd.1} parent=11 // pred_check
        %p162 = pneg %p108
      $region18: #{full_stride_deconv_nd.1} parent=11 // pred_check_branch
        %164 = sbr.rel (%p162) target = $region20
      $region19: #{full_stride_deconv_nd.1} parent=11 // pred_region
        %s165 = smul.u32 16, %s19
        %p166 = scmp.lt.s32.totalorder %s165, 15
        %s167 = scalar_select %p166, %s165, 15
        %s168 = smul.addr %s167, 8
        %s169 = scalar_lea.vmem %s2, %s168
        %s170 = smul.u32 16, %s19
      $region20: #{full_stride_deconv_nd.1} parent=11 // pred_fallthru
        _
    $region12: #{full_stride_deconv_nd.1} parent=5 // pred_fallthru
      _
    %p171 = scmp.lt.s32.totalorder %s9, 2
    // Predicated region
    $region21: #{full_stride_deconv_nd.1} parent=5 // pred_check
      %p172 = pneg %p171
    $region22: #{full_stride_deconv_nd.1} parent=5 // pred_check_branch
      %174 = sbr.rel (%p172) target = $region24
    $region23: #{full_stride_deconv_nd.1} parent=5 // pred_region
      // Predicated region
      $region25: #{full_stride_deconv_nd.1} parent=23 // pred_check
        %p175 = pneg %p76
      $region26: #{full_stride_deconv_nd.1} parent=23 // pred_check_branch
        %177 = sbr.rel (%p175) target = $region28
      $region27: #{full_stride_deconv_nd.1} parent=23 // pred_region
        %s178 = smul.u32 2, %s18
        %p179 = scmp.lt.s32.totalorder %s17, 1
        %s180 = scalar_select %p179, %s17, 1
        %p181 = scmp.lt.s32.totalorder %s178, 1
        %s182 = scalar_select %p181, %s178, 1
        %s183 = smul.addr %s180, 2
        %s184 = sadd.s32 %s182, %s183
        %s185 = smul.addr %s184, 4
        %s186 = scalar_lea.vmem %s1, %s185
        %s187 = smul.u32 2, %s18
      $region28: #{full_stride_deconv_nd.1} parent=23 // pred_fallthru
        _
    $region24: #{full_stride_deconv_nd.1} parent=5 // pred_fallthru
      _
    %p188 = scmp.le.s32.totalorder 1, %s9
    %p189 = scmp.lt.s32.totalorder %s9, 3
    %p190 = pnand %p188, %p189
    %p191 = pneg %p190
    // Predicated region
    $region29: #{full_stride_deconv_nd.1} parent=5 // pred_check
      _
    $region30: #{full_stride_deconv_nd.1} parent=5 // pred_check_branch
      %193 = sbr.rel (%p190) target = $region32
    $region31: #{full_stride_deconv_nd.1} parent=5 // pred_region
      %s194 = ssub.s32 %s9, 1
      %s195 = smul.u32 16, %s19
      %p196 = scmp.lt.s32.totalorder %s195, 15
      %s197 = scalar_select %p196, %s195, 15
      %s198 = smul.addr %s197, 8
      %s199 = scalar_lea.vmem %s0, %s198
      %p200 = pneg %p54
      %p201 = pneg %p51
      %s202 = smul.u32 2, %s21
      %p203 = scmp.lt.s32.totalorder %s20, 1
      %s204 = scalar_select %p203, %s20, 1
      %p205 = scmp.lt.s32.totalorder %s202, 1
      %s206 = scalar_select %p205, %s202, 1
      %s207 = smul.addr %s204, 2
      %s208 = sadd.s32 %s206, %s207
      %s209 = smul.addr %s208, 4
      %s210 = scalar_lea.vmem %s1, %s209
      %p211 = pneg %p82
      %p212 = pneg %p79
      %s213 = smul.u32 16, %s19
      %p214 = scmp.lt.s32.totalorder %s213, 15
      %s215 = scalar_select %p214, %s213, 15
      %s216 = smul.addr %s215, 8
      %s217 = scalar_lea.vmem %s2, %s216
      %p218 = pneg %p108
      %p219 = pneg %p105
      %p220 = pneg %p138
      %p221 = pneg %p135
      %s222 = smul.u32 16, %s19
      %s223 = smul.u32 2, %s21
      %p224 = scmp.lt.s32.totalorder %s20, 1
      %s225 = scalar_select %p224, %s20, 1
      %p226 = scmp.lt.s32.totalorder %s222, 15
      %s227 = scalar_select %p226, %s222, 15
      %p228 = scmp.lt.s32.totalorder %s223, 1
      %s229 = scalar_select %p228, %s223, 1
      %s230 = smul.addr %s227, 2
      %s231 = sadd.s32 %s229, %s230
      %s232 = smul.addr %s225, 32
      %s233 = sadd.s32 %s231, %s232
      %s234 = smul.addr %s233, 8
      %s235 = scalar_lea.vmem %s3, %s234
      %s236 = smul.u32 16, %s19
      %p237 = scmp.lt.s32.totalorder %s236, 15
      %s238 = scalar_select %p237, %s236, 15
      %s239 = smul.addr %s238, 8
      %s240 = scalar_lea.vmem %s0, %s239
      %s241 = smul.u32 16, %s19
      %s242 = smul.u32 2, %s21
      %p243 = scmp.lt.s32.totalorder %s20, 1
      %s244 = scalar_select %p243, %s20, 1
      %p245 = scmp.lt.s32.totalorder %s242, 1
      %s246 = scalar_select %p245, %s242, 1
      %s247 = smul.addr %s244, 2
      %s248 = sadd.s32 %s246, %s247
      %s249 = smul.addr %s248, 4
      %s250 = scalar_lea.vmem %s1, %s249
      %s251 = smul.u32 2, %s21
      %s252 = smul.u32 16, %s19
      %p253 = scmp.lt.s32.totalorder %s252, 15
      %s254 = scalar_select %p253, %s252, 15
      %s255 = smul.addr %s254, 8
      %s256 = scalar_lea.vmem %s2, %s255
      %s257 = smul.u32 16, %s19
      %s258 = smul.u32 16, %s19
      %s259 = smul.u32 2, %s21
      %p260 = scmp.lt.s32.totalorder %s20, 1
      %s261 = scalar_select %p260, %s20, 1
      %p262 = scmp.lt.s32.totalorder %s258, 15
      %s263 = scalar_select %p262, %s258, 15
      %p264 = scmp.lt.s32.totalorder %s259, 1
      %s265 = scalar_select %p264, %s259, 1
      %s266 = smul.addr %s263, 2
      %s267 = sadd.s32 %s265, %s266
      %s268 = smul.addr %s261, 32
      %s269 = sadd.s32 %s267, %s268
      %s270 = smul.addr %s269, 8
      %s271 = scalar_lea.vmem %s3, %s270
      %s272 = smul.u32 16, %s19
      %s273 = smul.u32 2, %s21
      %v274 = vld [vmem:[%s240] sm:$0xff]
      %v275 = vld [vmem:[%s240 + $0x8] sm:$0xff]
      %v276 = vld [vmem:[%s240 + $0x10] sm:$0xff]
      %v277 = vld [vmem:[%s240 + $0x18] sm:$0xff]
      %v278 = vld [vmem:[%s240 + $0x20] sm:$0xff]
      %v279 = vld [vmem:[%s240 + $0x28] sm:$0xff]
      %v280 = vld [vmem:[%s240 + $0x30] sm:$0xff]
      %v281 = vld [vmem:[%s240 + $0x38] sm:$0xff]
      %v282 = vld [vmem:[%s240 + $0x40] sm:$0xff]
      %v283 = vld [vmem:[%s240 + $0x48] sm:$0xff]
      %v284 = vld [vmem:[%s240 + $0x50] sm:$0xff]
      %v285 = vld [vmem:[%s240 + $0x58] sm:$0xff]
      %v286 = vld [vmem:[%s240 + $0x60] sm:$0xff]
      %v287 = vld [vmem:[%s240 + $0x68] sm:$0xff]
      %v288 = vld [vmem:[%s240 + $0x70] sm:$0xff]
      %v289 = vld [vmem:[%s240 + $0x78] sm:$0xff]
      %v290 = vld [vmem:[%s250] sm:$0xff]
      %v291 = vld [vmem:[%s256] sm:$0xff]
      %v292 = vld [vmem:[%s256 + $0x8] sm:$0xff]
      %v293 = vld [vmem:[%s256 + $0x10] sm:$0xff]
      %v294 = vld [vmem:[%s256 + $0x18] sm:$0xff]
      %v295 = vld [vmem:[%s256 + $0x20] sm:$0xff]
      %v296 = vld [vmem:[%s256 + $0x28] sm:$0xff]
      %v297 = vld [vmem:[%s256 + $0x30] sm:$0xff]
      %v298 = vld [vmem:[%s256 + $0x38] sm:$0xff]
      %v299 = vld [vmem:[%s256 + $0x40] sm:$0xff]
      %v300 = vld [vmem:[%s256 + $0x48] sm:$0xff]
      %v301 = vld [vmem:[%s256 + $0x50] sm:$0xff]
      %v302 = vld [vmem:[%s256 + $0x58] sm:$0xff]
      %v303 = vld [vmem:[%s256 + $0x60] sm:$0xff]
      %v304 = vld [vmem:[%s256 + $0x68] sm:$0xff]
      %v305 = vld [vmem:[%s256 + $0x70] sm:$0xff]
      %v306 = vld [vmem:[%s256 + $0x78] sm:$0xff]
      %308 = vset.pattern.permute.xlu0 0
      %309 = vperm.xlu0 %308, %v291
      %v310 = vpop.permute.xlu0 %309
      %313 = vset.pattern.permute.xlu0 0
      %314 = vperm.xlu0 %313, %v292
      %v315 = vpop.permute.xlu0 %314
      %318 = vset.pattern.permute.xlu0 0
      %319 = vperm.xlu0 %318, %v293
      %v320 = vpop.permute.xlu0 %319
      %323 = vset.pattern.permute.xlu0 0
      %324 = vperm.xlu0 %323, %v294
      %v325 = vpop.permute.xlu0 %324
      %328 = vset.pattern.permute.xlu0 0
      %329 = vperm.xlu0 %328, %v295
      %v330 = vpop.permute.xlu0 %329
      %333 = vset.pattern.permute.xlu0 0
      %334 = vperm.xlu0 %333, %v296
      %v335 = vpop.permute.xlu0 %334
      %338 = vset.pattern.permute.xlu0 0
      %339 = vperm.xlu0 %338, %v297
      %v340 = vpop.permute.xlu0 %339
      %343 = vset.pattern.permute.xlu0 0
      %344 = vperm.xlu0 %343, %v298
      %v345 = vpop.permute.xlu0 %344
      %348 = vset.pattern.permute.xlu0 0
      %349 = vperm.xlu0 %348, %v299
      %v350 = vpop.permute.xlu0 %349
      %353 = vset.pattern.permute.xlu0 0
      %354 = vperm.xlu0 %353, %v300
      %v355 = vpop.permute.xlu0 %354
      %358 = vset.pattern.permute.xlu0 0
      %359 = vperm.xlu0 %358, %v301
      %v360 = vpop.permute.xlu0 %359
      %363 = vset.pattern.permute.xlu0 0
      %364 = vperm.xlu0 %363, %v302
      %v365 = vpop.permute.xlu0 %364
      %368 = vset.pattern.permute.xlu0 0
      %369 = vperm.xlu0 %368, %v303
      %v370 = vpop.permute.xlu0 %369
      %373 = vset.pattern.permute.xlu0 0
      %374 = vperm.xlu0 %373, %v304
      %v375 = vpop.permute.xlu0 %374
      %378 = vset.pattern.permute.xlu0 0
      %379 = vperm.xlu0 %378, %v305
      %v380 = vpop.permute.xlu0 %379
      %383 = vset.pattern.permute.xlu0 0
      %384 = vperm.xlu0 %383, %v306
      %v385 = vpop.permute.xlu0 %384
      %v388 = vcombine.high %v290, %v290
      %vm389 = vcmask 31744
      %v391 = vsel %vm389, %v274, 0
      %v394 = vsel %vm389, %v275, 0
      %v397 = vsel %vm389, %v276, 0
      %v400 = vsel %vm389, %v277, 0
      %v403 = vsel %vm389, %v278, 0
      %v406 = vsel %vm389, %v279, 0
      %v409 = vsel %vm389, %v280, 0
      %v412 = vsel %vm389, %v281, 0
      %v415 = vsel %vm389, %v282, 0
      %v418 = vsel %vm389, %v283, 0
      %v421 = vsel %vm389, %v284, 0
      %v424 = vsel %vm389, %v285, 0
      %v427 = vsel %vm389, %v286, 0
      %v430 = vsel %vm389, %v287, 0
      %v433 = vsel %vm389, %v288, 0
      %v436 = vsel %vm389, %v289, 0
      %vm438 = vcmask 1043456
      %v439 = vsel %vm438, %v290, 0
      %v441 = vsel %vm438, %v388, 0
      %443 = vmatprep.subr.mxu0 %v441
      %444 = vmatpush1.msra.mxu0 %v439
      %445 = vmatprep.subr.mxu0 0.0
      %446 = vmatpush1.msra.mxu0 0.0
      %447 = vmatprep.subr.mxu0 0.0
      %448 = vmatpush1.msra.mxu0 0.0
      %449 = vmatprep.subr.mxu0 0.0
      %450 = vmatpush1.msra.mxu0 0.0
      %451 = vmatprep.subr.mxu0 0.0
      %452 = vmatpush1.msra.mxu0 0.0
      %453 = vmatprep.subr.mxu0 0.0
      %454 = vmatpush1.msra.mxu0 0.0
      %455 = vmatprep.subr.mxu0 0.0
      %456 = vmatpush1.msra.mxu0 0.0
      %457 = vmatprep.subr.mxu0 0.0
      %458 = vmatpush1.msra.mxu0 0.0
      %459 = vmatprep.subr.mxu0 0.0
      %460 = vmatpush1.msra.mxu0 0.0
      %461 = vmatprep.subr.mxu0 0.0
      %462 = vmatpush1.msra.mxu0 0.0
      %463 = vmatprep.subr.mxu0 0.0
      %464 = vmatpush1.msra.mxu0 0.0
      %465 = vmatprep.subr.mxu0 0.0
      %466 = vmatpush1.msra.mxu0 0.0
      %467 = vmatprep.subr.mxu0 0.0
      %468 = vmatpush1.msra.mxu0 0.0
      %469 = vmatprep.subr.mxu0 0.0
      %470 = vmatpush1.msra.mxu0 0.0
      %471 = vmatprep.subr.mxu0 0.0
      %472 = vmatpush1.msra.mxu0 0.0
      %473 = vmatprep.subr.mxu0 0.0
      %474 = vmatpush1.msra.mxu0 0.0
      %475 = vmatprep.subr.mxu0 0.0
      %476 = vmatpush1.msra.mxu0 0.0
      %477 = vmatprep.subr.mxu0 0.0
      %478 = vmatpush1.msra.mxu0 0.0
      %479 = vmatprep.subr.mxu0 0.0
      %480 = vmatpush1.msra.mxu0 0.0
      %481 = vmatprep.subr.mxu0 0.0
      %482 = vmatpush1.msra.mxu0 0.0
      %483 = vmatprep.subr.mxu0 0.0
      %484 = vmatpush1.msra.mxu0 0.0
      %485 = vmatprep.subr.mxu0 0.0
      %486 = vmatpush1.msra.mxu0 0.0
      %487 = vmatprep.subr.mxu0 0.0
      %488 = vmatpush1.msra.mxu0 0.0
      %489 = vmatprep.subr.mxu0 0.0
      %490 = vmatpush1.msra.mxu0 0.0
      %491 = vmatprep.subr.mxu0 0.0
      %492 = vmatpush1.msra.mxu0 0.0
      %493 = vmatprep.subr.mxu0 0.0
      %494 = vmatpush1.msra.mxu0 0.0
      %495 = vmatprep.subr.mxu0 0.0
      %496 = vmatpush1.msra.mxu0 0.0
      %497 = vmatprep.subr.mxu0 0.0
      %498 = vmatpush1.msra.mxu0 0.0
      %499 = vmatprep.subr.mxu0 0.0
      %500 = vmatpush1.msra.mxu0 0.0
      %501 = vmatprep.subr.mxu0 0.0
      %502 = vmatpush1.msra.mxu0 0.0
      %503 = vmatprep.subr.mxu0 0.0
      %504 = vmatpush1.msra.mxu0 0.0
      %505 = vmatprep.subr.mxu0 0.0
      %506 = vmatpush1.msra.mxu0 0.0
      %507 = vmatprep.mubr.f32.mxu0 0.0
      %508 = vmatmul.mubr.f32.gmra.mrb[0].mxu0 %v391
      %v509 = vpop.f32.mrb[0].mxu0
      %v510 = vadd.f32 %v310, %v509
      %v511 = vpop.f32.mrb[0].mxu0
      %v512 = vadd.f32 %v310, %v511
      %513 = vmatprep.mubr.f32.mxu0 0.0
      %514 = vmatmul.mubr.f32.gmra.mrb[0].mxu0 %v394
      %v515 = vpop.f32.mrb[0].mxu0
      %v516 = vadd.f32 %v315, %v515
      %v517 = vpop.f32.mrb[0].mxu0
      %v518 = vadd.f32 %v315, %v517
      %519 = vmatprep.mubr.f32.mxu0 0.0
      %520 = vmatmul.mubr.f32.gmra.mrb[0].mxu0 %v397
      %v521 = vpop.f32.mrb[0].mxu0
      %v522 = vadd.f32 %v320, %v521
      %v523 = vpop.f32.mrb[0].mxu0
      %v524 = vadd.f32 %v320, %v523
      %525 = vmatprep.mubr.f32.mxu0 0.0
      %526 = vmatmul.mubr.f32.gmra.mrb[0].mxu0 %v400
      %v527 = vpop.f32.mrb[0].mxu0
      %v528 = vadd.f32 %v325, %v527
      %v529 = vpop.f32.mrb[0].mxu0
      %v530 = vadd.f32 %v325, %v529
      %531 = vmatprep.mubr.f32.mxu0 0.0
      %532 = vmatmul.mubr.f32.gmra.mrb[0].mxu0 %v403
      %v533 = vpop.f32.mrb[0].mxu0
      %v534 = vadd.f32 %v330, %v533
      %v535 = vpop.f32.mrb[0].mxu0
      %v536 = vadd.f32 %v330, %v535
      %537 = vmatprep.mubr.f32.mxu0 0.0
      %538 = vmatmul.mubr.f32.gmra.mrb[0].mxu0 %v406
      %v539 = vpop.f32.mrb[0].mxu0
      %v540 = vadd.f32 %v335, %v539
      %v541 = vpop.f32.mrb[0].mxu0
      %v542 = vadd.f32 %v335, %v541
      %543 = vmatprep.mubr.f32.mxu0 0.0
      %544 = vmatmul.mubr.f32.gmra.mrb[0].mxu0 %v409
      %v545 = vpop.f32.mrb[0].mxu0
      %v546 = vadd.f32 %v340, %v545
      %v547 = vpop.f32.mrb[0].mxu0
      %v548 = vadd.f32 %v340, %v547
      %549 = vmatprep.mubr.f32.mxu0 0.0
      %550 = vmatmul.mubr.f32.gmra.mrb[0].mxu0 %v412
      %v551 = vpop.f32.mrb[0].mxu0
      %v552 = vadd.f32 %v345, %v551
      %v553 = vpop.f32.mrb[0].mxu0
      %v554 = vadd.f32 %v345, %v553
      %555 = vmatprep.mubr.f32.mxu0 0.0
      %556 = vmatmul.mubr.f32.gmra.mrb[0].mxu0 %v415
      %v557 = vpop.f32.mrb[0].mxu0
      %v558 = vadd.f32 %v350, %v557
      %v559 = vpop.f32.mrb[0].mxu0
      %v560 = vadd.f32 %v350, %v559
      %561 = vmatprep.mubr.f32.mxu0 0.0
      %562 = vmatmul.mubr.f32.gmra.mrb[0].mxu0 %v418
      %v563 = vpop.f32.mrb[0].mxu0
      %v564 = vadd.f32 %v355, %v563
      %v565 = vpop.f32.mrb[0].mxu0
      %v566 = vadd.f32 %v355, %v565
      %567 = vmatprep.mubr.f32.mxu0 0.0
      %568 = vmatmul.mubr.f32.gmra.mrb[0].mxu0 %v421
      %v569 = vpop.f32.mrb[0].mxu0
      %v570 = vadd.f32 %v360, %v569
      %v571 = vpop.f32.mrb[0].mxu0
      %v572 = vadd.f32 %v360, %v571
      %573 = vmatprep.mubr.f32.mxu0 0.0
      %574 = vmatmul.mubr.f32.gmra.mrb[0].mxu0 %v424
      %v575 = vpop.f32.mrb[0].mxu0
      %v576 = vadd.f32 %v365, %v575
      %v577 = vpop.f32.mrb[0].mxu0
      %v578 = vadd.f32 %v365, %v577
      %579 = vmatprep.mubr.f32.mxu0 0.0
      %580 = vmatmul.mubr.f32.gmra.mrb[0].mxu0 %v427
      %v581 = vpop.f32.mrb[0].mxu0
      %v582 = vadd.f32 %v370, %v581
      %v583 = vpop.f32.mrb[0].mxu0
      %v584 = vadd.f32 %v370, %v583
      %585 = vmatprep.mubr.f32.mxu0 0.0
      %586 = vmatmul.mubr.f32.gmra.mrb[0].mxu0 %v430
      %v587 = vpop.f32.mrb[0].mxu0
      %v588 = vadd.f32 %v375, %v587
      %v589 = vpop.f32.mrb[0].mxu0
      %v590 = vadd.f32 %v375, %v589
      %591 = vmatprep.mubr.f32.mxu0 0.0
      %592 = vmatmul.mubr.f32.gmra.mrb[0].mxu0 %v433
      %v593 = vpop.f32.mrb[0].mxu0
      %v594 = vadd.f32 %v380, %v593
      %v595 = vpop.f32.mrb[0].mxu0
      %v596 = vadd.f32 %v380, %v595
      %597 = vmatprep.mubr.f32.mxu0 0.0
      %598 = vmatmul.mubr.f32.gmra.mrb[0].mxu0 %v436
      %v599 = vpop.f32.mrb[0].mxu0
      %v600 = vadd.f32 %v385, %v599
      %v601 = vpop.f32.mrb[0].mxu0
      %v602 = vadd.f32 %v385, %v601
      %603 = vdwg.mxu0
      %604 = vst [vmem:[%s271] sm:$0xff] %v510
      %605 = vst [vmem:[%s271 + $0x8] sm:$0xff] %v512
      %606 = vst [vmem:[%s271 + $0x10] sm:$0xff] %v516
      %607 = vst [vmem:[%s271 + $0x18] sm:$0xff] %v518
      %608 = vst [vmem:[%s271 + $0x20] sm:$0xff] %v522
      %609 = vst [vmem:[%s271 + $0x28] sm:$0xff] %v524
      %610 = vst [vmem:[%s271 + $0x30] sm:$0xff] %v528
      %611 = vst [vmem:[%s271 + $0x38] sm:$0xff] %v530
      %612 = vst [vmem:[%s271 + $0x40] sm:$0xff] %v534
      %613 = vst [vmem:[%s271 + $0x48] sm:$0xff] %v536
      %614 = vst [vmem:[%s271 + $0x50] sm:$0xff] %v540
      %615 = vst [vmem:[%s271 + $0x58] sm:$0xff] %v542
      %616 = vst [vmem:[%s271 + $0x60] sm:$0xff] %v546
      %617 = vst [vmem:[%s271 + $0x68] sm:$0xff] %v548
      %618 = vst [vmem:[%s271 + $0x70] sm:$0xff] %v552
      %619 = vst [vmem:[%s271 + $0x78] sm:$0xff] %v554
      %620 = vst [vmem:[%s271 + $0x80] sm:$0xff] %v558
      %621 = vst [vmem:[%s271 + $0x88] sm:$0xff] %v560
      %622 = vst [vmem:[%s271 + $0x90] sm:$0xff] %v564
      %623 = vst [vmem:[%s271 + $0x98] sm:$0xff] %v566
      %624 = vst [vmem:[%s271 + $0xa0] sm:$0xff] %v570
      %625 = vst [vmem:[%s271 + $0xa8] sm:$0xff] %v572
      %626 = vst [vmem:[%s271 + $0xb0] sm:$0xff] %v576
      %627 = vst [vmem:[%s271 + $0xb8] sm:$0xff] %v578
      %628 = vst [vmem:[%s271 + $0xc0] sm:$0xff] %v582
      %629 = vst [vmem:[%s271 + $0xc8] sm:$0xff] %v584
      %630 = vst [vmem:[%s271 + $0xd0] sm:$0xff] %v588
      %631 = vst [vmem:[%s271 + $0xd8] sm:$0xff] %v590
      %632 = vst [vmem:[%s271 + $0xe0] sm:$0xff] %v594
      %633 = vst [vmem:[%s271 + $0xe8] sm:$0xff] %v596
      %634 = vst [vmem:[%s271 + $0xf0] sm:$0xff] %v600
      %635 = vst [vmem:[%s271 + $0xf8] sm:$0xff] %v602
      %s636 = smul.u32 16, %s19
      %s637 = smul.u32 2, %s21
      %p638 = scmp.lt.s32.totalorder %s20, 1
      %s639 = scalar_select %p638, %s20, 1
      %p640 = scmp.lt.s32.totalorder %s636, 15
      %s641 = scalar_select %p640, %s636, 15
      %p642 = scmp.lt.s32.totalorder %s637, 1
      %s643 = scalar_select %p642, %s637, 1
      %s644 = smul.addr %s641, 2
      %s645 = sadd.s32 %s643, %s644
      %s646 = smul.addr %s639, 32
      %s647 = sadd.s32 %s645, %s646
      %s648 = smul.addr %s647, 8
      %s649 = scalar_lea.vmem %s3, %s648
      // Predicated region
      $region33: #{full_stride_deconv_nd.1} parent=31 // pred_check
        %p650 = pneg %p135
      $region34: #{full_stride_deconv_nd.1} parent=31 // pred_check_branch
        %652 = sbr.rel (%p650) target = $region36
      $region35: #{full_stride_deconv_nd.1} parent=31 // pred_region
        %s653 = smul.u32 16, %s19
        %s654 = smul.u32 2, %s21
      $region36: #{full_stride_deconv_nd.1} parent=31 // pred_fallthru
        _
    $region32: #{full_stride_deconv_nd.1} parent=5 // pred_fallthru
      _
    %p655 = scmp.le.s32.totalorder 2, %s9
    // Predicated region
    $region37: #{full_stride_deconv_nd.1} parent=5 // pred_check
      %p656 = pneg %p655
    $region38: #{full_stride_deconv_nd.1} parent=5 // pred_check_branch
      %658 = sbr.rel (%p656) target = $region40
    $region39: #{full_stride_deconv_nd.1} parent=5 // pred_region
      %s659 = ssub.s32 %s9, 2
      // Predicated region
      $region41: #{full_stride_deconv_nd.1} parent=39 // pred_check
        %p660 = pneg %p141
      $region42: #{full_stride_deconv_nd.1} parent=39 // pred_check_branch
        %662 = sbr.rel (%p660) target = $region44
      $region43: #{full_stride_deconv_nd.1} parent=39 // pred_region
        %s663 = smul.u32 16, %s22
        %s664 = smul.u32 2, %s24
        %p665 = scmp.lt.s32.totalorder %s23, 1
        %s666 = scalar_select %p665, %s23, 1
        %p667 = scmp.lt.s32.totalorder %s663, 15
        %s668 = scalar_select %p667, %s663, 15
        %p669 = scmp.lt.s32.totalorder %s664, 1
        %s670 = scalar_select %p669, %s664, 1
        %s671 = smul.addr %s668, 2
        %s672 = sadd.s32 %s670, %s671
        %s673 = smul.addr %s666, 32
        %s674 = sadd.s32 %s672, %s673
        %s675 = smul.addr %s674, 8
        %s676 = scalar_lea.vmem %s3, %s675
      $region44: #{full_stride_deconv_nd.1} parent=39 // pred_fallthru
        _
    $region40: #{full_stride_deconv_nd.1} parent=5 // pred_fallthru
      _
  $region6: #{full_stride_deconv_nd.1} parent=0 // loop_footer
    %s13 = sadd.s32 1, %s9
  $region7: #{full_stride_deconv_nd.1} parent=0 // loop_footer_branch
    %8 = sbr.rel target = $region3
  $region8: #{full_stride_deconv_nd.1} parent=0 // loop_exit
    _

</llo_original>
